<compile_context>
chip_gen: v7x
topology: tpu7x:2x2x1
jax: 0.10.0
libtpu: 0.0.40
codegen_flags: <defaults>
</compile_context>

<pallas_src>
import jax
import jax.numpy as jnp
from jax.experimental import pallas as pl
from jax.experimental.pallas import tpu as pltpu


_MIN_PALLAS_ELEMS = 1 << 20   # below this, XLA's fused reduce beats kernel launch


def _round_up(x, m):
    return ((x + m - 1) // m) * m


def _cdiv(a, b):
    return -(-a // b)


def _make_sse_kernel(valid_rows, need_mask):
    """Streams (tr,128) tiles and accumulates sum((p-t)^2) into an (8,128) block."""

    def kernel(pred_ref, true_ref, out_ref):
        c = pl.program_id(0)            # partition / core axis
        i = pl.program_id(1)            # reduction axis
        k_steps = pl.num_programs(1)
        tr = pred_ref.shape[0]

        @pl.when(i == 0)
        def _init():
            out_ref[...] = jnp.zeros_like(out_ref)

        # Cast in-kernel; inputs stay in their native dtype in HBM/VMEM.
        d = pred_ref[...].astype(jnp.float32) - true_ref[...].astype(jnp.float32)
        d2 = d * d

        if need_mask:
            # Rows beyond the logical array are pipeline padding (stale VMEM);
            # zero them via a select on the global row index.
            row0 = (c * k_steps + i) * tr
            rows = row0 + jax.lax.broadcasted_iota(jnp.int32, (tr, 128), 0)
            d2 = jnp.where(rows < valid_rows, d2, 0.0)

        # Sublane-aligned fold (tr,128) -> (8,128): pure VPU vreg adds, no XLU;
        # accumulate directly into the resident output block (no big scratch).
        out_ref[...] += jnp.sum(d2.reshape(tr // 8, 8, 128), axis=0)

    return kernel


def _sse_pallas(pred, true):
    """Sum of squared errors over all elements, streamed through VMEM."""
    n_elems = pred.size
    itemsize = jnp.dtype(pred.dtype).itemsize

    flat_p = pred.reshape(-1)
    flat_t = true.reshape(-1)

    # Ragged sub-128 lane tail: tiny zero pad (zeros contribute 0 to the SSE).
    # TODO(synk): if n % 128 != 0 ever shows up on a hot path, avoid this
    #             full-copy pad via allow_input_fusion or element-level masking.
    rem = n_elems % 128
    if rem:
        flat_p = jnp.pad(flat_p, (0, 128 - rem))
        flat_t = jnp.pad(flat_t, (0, 128 - rem))
    R = flat_p.size // 128
    p2d = flat_p.reshape(R, 128)
    t2d = flat_t.reshape(R, 128)

    # ---- per-generation tiling -------------------------------------------
    kind = jax.devices()[0].device_kind.lower()
    is_v7 = ("v7" in kind) or ("7x" in kind)
    small_scoped_vmem = ("v5" in kind) or ("v4" in kind)

    # Per-input-per-buffer byte budget: big tiles amortize the ~0.35us/step
    # fixed pipeline overhead while respecting each generation's VMEM.
    buf_budget = (2 if small_scoped_vmem else 4) << 20
    tr_target = max(16, (buf_budget // (128 * itemsize)) // 16 * 16)

    # Two partials (one per TensorCore) only on v7x and only with enough work;
    # single-TC chips keep a size-1 leading axis (free).
    num_parts = 2 if (is_v7 and R >= 32) else 1
    rows_per_part = _cdiv(R, num_parts)
    tr = min(tr_target, _round_up(rows_per_part, 16), (R // 8) * 8)
    tr = max(8, (tr // 8) * 8)
    K = _cdiv(R, num_parts * tr)
    covered = num_parts * K * tr
    need_mask = covered != R

    # Clamp block indices so no block starts past the array; fully-clamped
    # blocks are zeroed by the in-kernel row mask.
    last_blk = _cdiv(R, tr) - 1

    def in_map(c, i):
        return (jnp.minimum(c * K + i, last_blk), 0)

    # Input double-buffers dominate VMEM; output block is only 4 KiB.
    vmem_need = 2 * 2 * tr * 128 * itemsize + (4 << 20)
    vmem_cap = (30 if is_v7 else 64) << 20          # v7x: 64 MiB physical / TC
    vmem_limit = int(min(vmem_cap, max(vmem_need, 32 << 20)))

    if num_parts == 2:
        dim_sem = (pltpu.CORE_PARALLEL, pltpu.ARBITRARY)
    else:
        dim_sem = ("arbitrary", "arbitrary")

    cost = pl.CostEstimate(
        flops=3 * n_elems,
        transcendentals=0,
        bytes_accessed=2 * n_elems * itemsize + num_parts * 8 * 128 * 4)

    partials = pl.pallas_call(
        _make_sse_kernel(R, need_mask),
        out_shape=jax.ShapeDtypeStruct((num_parts * 8, 128), jnp.float32),
        grid_spec=pltpu.PrefetchScalarGridSpec(
            num_scalar_prefetch=0,
            grid=(num_parts, K),
            in_specs=[
                pl.BlockSpec((tr, 128), in_map),
                pl.BlockSpec((tr, 128), in_map),
            ],
            out_specs=pl.BlockSpec((8, 128), lambda c, i: (c, 0)),
        ),
        compiler_params=pltpu.CompilerParams(
            dimension_semantics=dim_sem,
            vmem_limit_bytes=vmem_limit),
        cost_estimate=cost,
    )(p2d, t2d)

    # Final tiny cross-lane reduce on the (num_parts*8, 128) partials.
    return jnp.sum(partials)


def _plain_mse(pred, true):
    d = pred.astype(jnp.float32) - true.astype(jnp.float32)
    return jnp.mean(d * d)


def total_loss2(pred, true, mu, logvar, *, force_pallas=False):
    """JAX/Pallas equivalent of Total_Loss2(lossType='mse').forward."""
    # TODO(synk): the lossType='ce' (CrossEntropyLoss) branch is not
    #             implemented; only the default 'mse' path is reproduced.
    assert pred.shape == true.shape
    n_elems = pred.size

    use_pallas = (force_pallas or n_elems >= _MIN_PALLAS_ELEMS) and n_elems >= 1024
    if use_pallas:
        mse = _sse_pallas(pred, true) / float(n_elems)
    else:
        # Small-input fast path: launch/grid overhead dwarfs the reduction.
        mse = _plain_mse(pred, true)

    # KLD term: tiny (batch, latent) tensors -> plain JAX (hoisted out of the
    # streamed kernel per review).
    mu_f = mu.astype(jnp.float32)
    lv_f = logvar.astype(jnp.float32)
    kld = jnp.float32(-0.5) * jnp.sum(
        jnp.float32(1.0) + lv_f - mu_f * mu_f - jnp.exp(lv_f))

    return mse + kld


def _reference(pred, true, mu, logvar):
    mse = jnp.mean((pred.astype(jnp.float32) - true.astype(jnp.float32)) ** 2)
    kld = -0.5 * jnp.sum(1.0 + logvar - mu ** 2 - jnp.exp(logvar))
    return mse + kld


if __name__ == "__main__":
    key = jax.random.PRNGKey(0)
    k1, k2, k3, k4, k5, k6 = jax.random.split(key, 6)

    # Small VAE-style shapes:
    #   pred/true: reconstruction, NCHW (2, 4, 16, 16)
    #   mu/logvar: latent stats, (2, 32)
    pred = jax.random.normal(k1, (2, 4, 16, 16), dtype=jnp.float32)
    true = jax.random.normal(k2, (2, 4, 16, 16), dtype=jnp.float32)
    mu = 0.1 * jax.random.normal(k3, (2, 32), dtype=jnp.float32)
    logvar = 0.1 * jax.random.normal(k4, (2, 32), dtype=jnp.float32)

    out = jax.block_until_ready(
        total_loss2(pred, true, mu, logvar, force_pallas=True))
    ref = _reference(pred, true, mu, logvar)
    assert jnp.allclose(out, ref, rtol=1e-5, atol=1e-5), (out, ref)

    # Larger input: exercises the multi-tile streaming path, the row-tail
    # mask, and the automatic Pallas dispatch.
    pred2 = jax.random.normal(k5, (2, 4, 400, 400), dtype=jnp.float32)
    true2 = jax.random.normal(k6, (2, 4, 400, 400), dtype=jnp.float32)
    out2 = jax.block_until_ready(total_loss2(pred2, true2, mu, logvar))
    ref2 = _reference(pred2, true2, mu, logvar)
    assert jnp.allclose(out2, ref2, rtol=1e-4, atol=1e-4), (out2, ref2)

    print("KERNEL_OK")
</pallas_src>

<mosaic_0001>
module attributes {stable_mosaic.version = 11 : i64} {
  func.func @kernel(%arg0: i32, %arg1: i32, %arg2: memref<16x128xf32, #tpu.memory_space<vmem>>, %arg3: memref<16x128xf32, #tpu.memory_space<vmem>>, %arg4: memref<8x128xf32, #tpu.memory_space<vmem>>) attributes {dimension_semantics = [#tpu.dimension_semantics<arbitrary>, #tpu.dimension_semantics<arbitrary>], iteration_bounds = array<i64: 1, 1>, scalar_prefetch = 0 : i64, scratch_operands = 0 : i64, tpu.core_type = #tpu.core_type<tc>, window_params = [{transform_indices = @transform_0, window_bounds = array<i64: 16, 128>}, {transform_indices = @transform_1, window_bounds = array<i64: 16, 128>}, {transform_indices = @transform_2, window_bounds = array<i64: 8, 128>}]} {
    %c0_i32 = arith.constant 0 : i32
    %0 = arith.cmpi eq, %arg1, %c0_i32 : i32
    %1 = arith.extui %0 : i1 to i32
    %c0_i32_0 = arith.constant 0 : i32
    %2 = arith.cmpi ne, %1, %c0_i32_0 : i32
    scf.if %2 {
      %cst_8 = arith.constant 0.000000e+00 : f32
      %12 = vector.broadcast %cst_8 : f32 to vector<8x128xf32>
      %c0_9 = arith.constant 0 : index
      %c0_10 = arith.constant 0 : index
      %13 = vector.load %arg4[%c0_9, %c0_10] : memref<8x128xf32, #tpu.memory_space<vmem>>, vector<8x128xf32>
      tpu.vector_store %arg4[%c0_9, %c0_10], %12 {strides = array<i32>} : memref<8x128xf32, #tpu.memory_space<vmem>>, vector<8x128xf32>,
    } else {
    }
    %c0 = arith.constant 0 : index
    %c0_1 = arith.constant 0 : index
    %3 = vector.load %arg2[%c0, %c0_1] : memref<16x128xf32, #tpu.memory_space<vmem>>, vector<16x128xf32>
    %c0_2 = arith.constant 0 : index
    %c0_3 = arith.constant 0 : index
    %4 = vector.load %arg3[%c0_2, %c0_3] : memref<16x128xf32, #tpu.memory_space<vmem>>, vector<16x128xf32>
    %5 = arith.subf %3, %4 : vector<16x128xf32>
    %6 = arith.mulf %5, %5 : vector<16x128xf32>
    %c0_4 = arith.constant 0 : index
    %c0_5 = arith.constant 0 : index
    %7 = vector.load %arg4[%c0_4, %c0_5] : memref<8x128xf32, #tpu.memory_space<vmem>>, vector<8x128xf32>
    %8 = vector.shape_cast %6 : vector<16x128xf32> to vector<2x8x128xf32>
    %cst = arith.constant dense<0.000000e+00> : vector<8x128xf32>
    %9 = vector.multi_reduction <add>, %8, %cst [0] : vector<2x8x128xf32> to vector<8x128xf32>
    %10 = arith.addf %7, %9 : vector<8x128xf32>
    %c0_6 = arith.constant 0 : index
    %c0_7 = arith.constant 0 : index
    %11 = vector.load %arg4[%c0_6, %c0_7] : memref<8x128xf32, #tpu.memory_space<vmem>>, vector<8x128xf32>
    tpu.vector_store %arg4[%c0_6, %c0_7], %10 {strides = array<i32>} : memref<8x128xf32, #tpu.memory_space<vmem>>, vector<8x128xf32>,
    return
  }
  func.func @transform_0(%arg0: i32, %arg1: i32) -> (i32, i32) {
    %c1_i32 = arith.constant 1 : i32
    %0 = arith.muli %arg0, %c1_i32 : i32
    %1 = arith.addi %0, %arg1 : i32
    %c0_i32 = arith.constant 0 : i32
    %2 = arith.minsi %1, %c0_i32 : i32
    %c0_i32_0 = arith.constant 0 : i32
    %c0_i32_1 = arith.constant 0 : i32
    return %2, %c0_i32_0 : i32, i32
  }
  func.func @transform_1(%arg0: i32, %arg1: i32) -> (i32, i32) {
    %c1_i32 = arith.constant 1 : i32
    %0 = arith.muli %arg0, %c1_i32 : i32
    %1 = arith.addi %0, %arg1 : i32
    %c0_i32 = arith.constant 0 : i32
    %2 = arith.minsi %1, %c0_i32 : i32
    %c0_i32_0 = arith.constant 0 : i32
    %c0_i32_1 = arith.constant 0 : i32
    return %2, %c0_i32_0 : i32, i32
  }
  func.func @transform_2(%arg0: i32, %arg1: i32) -> (i32, i32) {
    %c0_i32 = arith.constant 0 : i32
    %c0_i32_0 = arith.constant 0 : i32
    return %arg0, %c0_i32 : i32, i32
  }
}

</mosaic_0001>

<llo_original>
// kernel: tpu_custom_call.1
$region0: #{tpu_custom_call.1}
  #allocation0 [shape = 'u32[]', space=smem, size = 0x4, offset = 0x4, fixed_abs, tag = 'smem constant byte address 0x4 - core index']
  #allocation1 [shape = 'u32[144,128]{1,0:T(1,128)}', space=vmem, size = 0x12000, scoped, tag = 'internal scratch']
  %s0 = inlined_call_operand.hbm [shape: f32[16,128], index: 0, kind: input, shape index: {}]
  %s1 = inlined_call_operand.hbm [shape: f32[16,128], index: 1, kind: input, shape index: {}]
  %s2 = inlined_call_operand.hbm [shape: f32[8,128], index: 2, kind: output, shape index: {}]
  %s3 = sld [smem:[#allocation0]]
  $region30: #{tpu_custom_call.1} parent=0
    _
  %s5 = ssub.s32 1, %s3
  %s6 = scalar_select 0, %s5, %s3
  $region1: #{tpu_custom_call.1} parent=0
    #allocation2 [shape = 'u8[8192]{0}', space=vmem, size = 0x2000, scoped, tag = 'input window, operand 0, single buffered']
    #allocation3 [shape = 's32[1]{0}', space=sflag, size = 0x4, scoped, tag = 'scoped memory for tpu_custom_call.1']
    #allocation4 [shape = 's32[1]{0}', space=sflag, size = 0x4, scoped, tag = 'scoped memory for tpu_custom_call.1']
    #allocation5 [shape = 'u8[8192]{0}', space=vmem, size = 0x2000, scoped, tag = 'input window, operand 1, single buffered']
    #allocation6 [shape = 's32[1]{0}', space=sflag, size = 0x4, scoped, tag = 'scoped memory for tpu_custom_call.1']
    #allocation7 [shape = 'u8[4096]{0}', space=vmem, size = 0x1000, scoped, tag = 'output window, operand 0, single buffered']
    %7 = vsyncpa [#allocation3], 0
    %8 = vsyncpa [#allocation6], 0
    %9 = vsyncpa [#allocation4], 0
    // Predicated region
    $region2: #{tpu_custom_call.1} parent=1 // pred_check
      _
    $region3: #{tpu_custom_call.1} parent=1 // pred_check_branch
      %11 = sbr.rel (0) target = $region5
    $region4: #{tpu_custom_call.1} parent=1 // pred_region
      %s12 = sadd.s32 0, 0
      %p13 = scmp.lt.s32.totalorder %s12, 0
      %s14 = scalar_select %p13, %s12, 0
      %s15 = smul.u32 2, %s14
      %s17 = ssub.s32 256, 256
      %18 = vsyncadd [#allocation3], %s17
      %s19 = smul.addr %s15, 128
      %s20 = scalar_lea.hbm %s0, %s19
      %s21 = sshll.u32 [#allocation2], 4
      %s22 = int_to_ptr.vmem [resolvable:$true] %s21
      %27 = dma.hbm_to_vmem [thread:$0]  %s20, 256, %s22, [#allocation3], 128, 128, 8
    $region5: #{tpu_custom_call.1} parent=1 // pred_fallthru
      _
    // Predicated region
    $region6: #{tpu_custom_call.1} parent=1 // pred_check
      _
    $region7: #{tpu_custom_call.1} parent=1 // pred_check_branch
      %29 = sbr.rel (0) target = $region9
    $region8: #{tpu_custom_call.1} parent=1 // pred_region
      %s30 = sadd.s32 0, 0
      %p31 = scmp.lt.s32.totalorder %s30, 0
      %s32 = scalar_select %p31, %s30, 0
      %s33 = smul.u32 2, %s32
      %s35 = ssub.s32 256, 256
      %36 = vsyncadd [#allocation6], %s35
      %s37 = smul.addr %s33, 128
      %s38 = scalar_lea.hbm %s1, %s37
      %s39 = sshll.u32 [#allocation5], 4
      %s40 = int_to_ptr.vmem [resolvable:$true] %s39
      %45 = dma.hbm_to_vmem [thread:$0]  %s38, 256, %s40, [#allocation6], 128, 128, 8
    $region9: #{tpu_custom_call.1} parent=1 // pred_fallthru
      _
    // Predicated region
    $region10: #{tpu_custom_call.1} parent=1 // pred_check
      _
    $region11: #{tpu_custom_call.1} parent=1 // pred_check_branch
      %47 = sbr.rel (0) target = $region13
    $region12: #{tpu_custom_call.1} parent=1 // pred_region
      %48 = dma.done [#allocation3], 256
    $region13: #{tpu_custom_call.1} parent=1 // pred_fallthru
      _
    // Predicated region
    $region14: #{tpu_custom_call.1} parent=1 // pred_check
      _
    $region15: #{tpu_custom_call.1} parent=1 // pred_check_branch
      %50 = sbr.rel (0) target = $region17
    $region16: #{tpu_custom_call.1} parent=1 // pred_region
      %51 = dma.done [#allocation6], 256
    $region17: #{tpu_custom_call.1} parent=1 // pred_fallthru
      _
    %s52 = sadd.s32 0, 0
    %p53 = scmp.lt.s32.totalorder %s52, 0
    %s54 = scalar_select %p53, %s52, 0
    %s55 = smul.u32 2, %s54
    %s56 = sadd.s32 0, 0
    %p57 = scmp.lt.s32.totalorder %s56, 0
    %s58 = scalar_select %p57, %s56, 0
    %s59 = smul.u32 2, %s58
    %p60 = scmp.eq.s32.totalorder 0, 0
    // Predicated region
    $region18: #{tpu_custom_call.1} parent=1 // pred_check
      %p61 = pneg %p60
    $region19: #{tpu_custom_call.1} parent=1 // pred_check_branch
      %63 = sbr.rel (%p61) target = $region21
    $region20: #{tpu_custom_call.1} parent=1 // pred_region
      %64 = vst [vmem:[#allocation7] sm:$0xff] 0.0
    $region21: #{tpu_custom_call.1} parent=1 // pred_fallthru
      _
    %v65 = vld [vmem:[#allocation2] sm:$0xff]
    %v66 = vld [vmem:[#allocation2 + $0x8] sm:$0xff]
    %v67 = vld [vmem:[#allocation5] sm:$0xff]
    %v68 = vld [vmem:[#allocation5 + $0x8] sm:$0xff]
    %v69 = vsub.f32 %v65, %v67
    %v70 = vsub.f32 %v66, %v68
    %v71 = vmul.f32 %v69, %v69
    %v72 = vmul.f32 %v70, %v70
    %v73 = vld [vmem:[#allocation7] sm:$0xff]
    %v74 = vadd.f32 %v71, %v72
    %v75 = vadd.f32 %v73, %v74
    %76 = vst [vmem:[#allocation7] sm:$0xff] %v75
    // Predicated region
    $region22: #{tpu_custom_call.1} parent=1 // pred_check
      _
    $region23: #{tpu_custom_call.1} parent=1 // pred_check_branch
      %78 = sbr.rel (0) target = $region25
    $region24: #{tpu_custom_call.1} parent=1 // pred_region
      %s80 = ssub.s32 128, 128
      %81 = vsyncadd [#allocation4], %s80
      %s83 = sshll.u32 [#allocation7], 4
      %s84 = int_to_ptr.vmem [resolvable:$true] %s83
      %86 = dma.vmem_to_hbm [thread:$0]  %s84, 128, %s2, [#allocation4]
    $region25: #{tpu_custom_call.1} parent=1 // pred_fallthru
      _
    // Predicated region
    $region26: #{tpu_custom_call.1} parent=1 // pred_check
      _
    $region27: #{tpu_custom_call.1} parent=1 // pred_check_branch
      %88 = sbr.rel (0) target = $region29
    $region28: #{tpu_custom_call.1} parent=1 // pred_region
      %89 = dma.done [#allocation4], 128
    $region29: #{tpu_custom_call.1} parent=1 // pred_fallthru
      _
    %90 = vsyncpa [#allocation3], 1
    %91 = vsyncpa [#allocation6], 1
    %92 = vsyncpa [#allocation4], 1

</llo_original>
